<compile_context>
chip_gen: v6e
topology: v6e:2x2x1
jax: 0.10.0
libtpu: 0.0.40
codegen_flags: <defaults>
</compile_context>

<pallas_src>
import math

import jax
import jax.numpy as jnp
from jax import lax
from jax.experimental import pallas as pl
from jax.experimental.pallas import tpu as pltpu

MIN_VALUE = 1.0
MAX_VALUE = 1.0

# Constant-output fast path is only valid when the two clamps pin to one value.
_USE_CONST_FASTPATH = (MIN_VALUE == MAX_VALUE)

# sigmoid(1.0): the value every finite input maps to after the clamp pair.
_CONST_OUT = 1.0 / (1.0 + math.exp(-float(MAX_VALUE)))

_LANES = 128
_SQRT_HALF = 0.7071067811865476  # 1/sqrt(2) (exact erf-based GELU)

_TARGET_BLOCK_BYTES = 4 * 1024 * 1024      # ~4 MiB per block, all generations
_MIN_STEPS_BYTES = 512 * 1024              # force >=4 grid steps above this
_SINGLE_BLOCK_UNALIGNED_BYTES = 4 * 1024 * 1024
# in + out, double-buffered, 4 MiB blocks = 16 MiB; leave headroom for scratch.
_VMEM_LIMIT_BYTES = 24 * 1024 * 1024


def _unary_chain_kernel(x_ref, o_ref):
    x = x_ref[...]
    if _USE_CONST_FASTPATH:
        # Constant for all finite inputs (incl. +/-inf: tanh saturates); NaN
        # propagates exactly as in tanh -> gelu -> clamp -> clamp -> sigmoid.
        const = jnp.asarray(_CONST_OUT, dtype=o_ref.dtype)
        o_ref[...] = jnp.where(jnp.isnan(x), x.astype(o_ref.dtype), const)
    else:
        # Full chain fallback (traced only if MIN_VALUE != MAX_VALUE).
        xf = x.astype(jnp.float32)
        t1 = jnp.tanh(xf)
        t2 = 0.5 * t1 * (1.0 + lax.erf(t1 * _SQRT_HALF))
        t3 = jnp.maximum(t2, MIN_VALUE)
        k6 = jnp.minimum(t3, MAX_VALUE)
        o_ref[...] = jax.nn.sigmoid(k6).astype(o_ref.dtype)


def _choose_block_rows(rows, itemsize):
    """Pick (block_rows, n_grid_steps) for a (rows, 128) slab."""
    bytes_per_row = _LANES * itemsize
    slab_bytes = rows * bytes_per_row
    # Constant ~4 MiB per block regardless of dtype width.
    max_block_rows = max(8, _TARGET_BLOCK_BYTES // bytes_per_row)
    # >=4 steps for non-trivial slabs: enables DMA/compute overlap and lets
    # dimension_semantics=("parallel",) shard across both v7x TensorCores.
    min_steps = 4 if slab_bytes > _MIN_STEPS_BYTES else 1
    n_steps = max(min_steps, pl.cdiv(rows, max_block_rows))
    block_rows = pl.cdiv(rows, n_steps)
    if block_rows >= rows:
        return rows, 1  # single full-extent block (legal for any row count)
    # Tiles smaller than the full dim must be a multiple of 8 sublanes.
    block_rows = ((block_rows + 7) // 8) * 8
    if block_rows >= rows:
        return rows, 1
    return block_rows, pl.cdiv(rows, block_rows)


def unary_chain(x, *, alias_input=False):
    """tanh -> gelu -> clamp_min(1) -> clamp_max(1) -> sigmoid, elementwise."""
    orig_shape = x.shape
    dtype = x.dtype
    n = x.size
    if n == 0:
        return x
    itemsize = jnp.dtype(dtype).itemsize
    total_bytes = n * itemsize

    cost = pl.CostEstimate(flops=0, transcendentals=0,
                           bytes_accessed=2 * total_bytes)
    io_aliases = {0: 0} if alias_input else {}
    flat = x.reshape(-1)

    if n % _LANES != 0:
        if total_bytes <= _SINGLE_BLOCK_UNALIGNED_BYTES:
            # Unaligned but small: one full-extent block, no pad / no slice.
            x2d = flat.reshape(1, n)
            out2d = pl.pallas_call(
                _unary_chain_kernel,
                out_shape=jax.ShapeDtypeStruct((1, n), dtype),
                grid_spec=pltpu.PrefetchScalarGridSpec(
                    num_scalar_prefetch=0,
                    grid=(1,),
                    in_specs=[pl.BlockSpec((1, n), lambda i: (0, 0))],
                    out_specs=pl.BlockSpec((1, n), lambda i: (0, 0)),
                ),
                compiler_params=pltpu.CompilerParams(
                    dimension_semantics=("parallel",),
                    vmem_limit_bytes=_VMEM_LIMIT_BYTES,
                ),
                cost_estimate=cost,
                input_output_aliases=io_aliases,
            )(x2d)
            return out2d.reshape(orig_shape)
        # Rare fallback: large AND not a multiple of 128 lanes.
        # TODO(synk): avoid the pad/slice copies for huge unaligned sizes.
        flat = jnp.pad(flat, (0, (-n) % _LANES))

    rows = flat.shape[0] // _LANES
    x2d = flat.reshape(rows, _LANES)
    block_rows, n_steps = _choose_block_rows(rows, itemsize)

    out2d = pl.pallas_call(
        _unary_chain_kernel,
        out_shape=jax.ShapeDtypeStruct((rows, _LANES), dtype),
        grid_spec=pltpu.PrefetchScalarGridSpec(
            num_scalar_prefetch=0,
            grid=(n_steps,),
            in_specs=[pl.BlockSpec((block_rows, _LANES), lambda i: (i, 0))],
            out_specs=pl.BlockSpec((block_rows, _LANES), lambda i: (i, 0)),
        ),
        compiler_params=pltpu.CompilerParams(
            dimension_semantics=("parallel",),
            vmem_limit_bytes=_VMEM_LIMIT_BYTES,
        ),
        cost_estimate=cost,
        input_output_aliases=io_aliases,
    )(x2d)

    out_flat = out2d.reshape(-1)
    if out_flat.shape[0] != n:
        out_flat = out_flat[:n]
    return out_flat.reshape(orig_shape)


def _reference(x):
    # Faithful full chain (exact erf-based GELU, matching torch defaults).
    t1 = jnp.tanh(x)
    t2 = 0.5 * t1 * (1.0 + lax.erf(t1 * _SQRT_HALF))
    t3 = jnp.maximum(t2, MIN_VALUE)
    k6 = jnp.minimum(t3, MAX_VALUE)
    return jax.nn.sigmoid(k6)


if __name__ == "__main__":
    key = jax.random.PRNGKey(0)

    # Main case from the module spec: (2, 4, 16, 16) f32.
    x = jax.random.normal(key, (2, 4, 16, 16), dtype=jnp.float32)
    out = unary_chain(x)
    jax.block_until_ready(out)
    ref = _reference(x)
    assert out.shape == x.shape and out.dtype == x.dtype
    assert jnp.max(jnp.abs(out - ref)) < 1e-6

    # NaN-propagation check (semantics of the original chain are preserved).
    x_nan = x.at[0, 0, 0, 0].set(jnp.nan)
    out_nan = unary_chain(x_nan)
    jax.block_until_ready(out_nan)
    assert bool(jnp.isnan(out_nan[0, 0, 0, 0]))
    assert jnp.max(jnp.abs(jnp.nan_to_num(out_nan - _reference(x_nan)))) < 1e-6

    # Multi-step (pipelined / megacore-shardable) path: 1 MiB slab -> 4 blocks.
    k2, k3 = jax.random.split(key)
    x_big = jax.random.normal(k2, (16, 4, 64, 64), dtype=jnp.float32)
    out_big = unary_chain(x_big)
    jax.block_until_ready(out_big)
    assert jnp.max(jnp.abs(out_big - _reference(x_big))) < 1e-6

    # Unaligned (n % 128 != 0) path: single full-extent block, no pad/slice.
    x_odd = jax.random.normal(k3, (3, 5, 7), dtype=jnp.float32)
    out_odd = unary_chain(x_odd)
    jax.block_until_ready(out_odd)
    assert out_odd.shape == x_odd.shape
    assert jnp.max(jnp.abs(out_odd - _reference(x_odd))) < 1e-6

    print("KERNEL_OK")
</pallas_src>

<mosaic_0001>
module attributes {stable_mosaic.version = 11 : i64} {
  func.func @_unary_chain_kernel(%arg0: i32, %arg1: memref<16x128xf32, #tpu.memory_space<vmem>>, %arg2: memref<16x128xf32, #tpu.memory_space<vmem>>) attributes {dimension_semantics = [#tpu.dimension_semantics<parallel>], iteration_bounds = array<i64: 1>, scalar_prefetch = 0 : i64, scratch_operands = 0 : i64, tpu.core_type = #tpu.core_type<tc>, window_params = [{transform_indices = @transform_0, window_bounds = array<i64: 16, 128>}, {transform_indices = @transform_1, window_bounds = array<i64: 16, 128>}]} {
    %c0 = arith.constant 0 : index
    %c0_0 = arith.constant 0 : index
    %0 = vector.load %arg1[%c0, %c0_0] : memref<16x128xf32, #tpu.memory_space<vmem>>, vector<16x128xf32>
    %1 = arith.cmpf one, %0, %0 : vector<16x128xf32>
    %cst = arith.constant 0.731058597 : f32
    %2 = vector.broadcast %cst : f32 to vector<16x128xf32>
    %3 = arith.select %1, %0, %2 : vector<16x128xi1>, vector<16x128xf32>
    %c0_1 = arith.constant 0 : index
    %c0_2 = arith.constant 0 : index
    %4 = vector.load %arg2[%c0_1, %c0_2] : memref<16x128xf32, #tpu.memory_space<vmem>>, vector<16x128xf32>
    tpu.vector_store %arg2[%c0_1, %c0_2], %3 {strides = array<i32>} : memref<16x128xf32, #tpu.memory_space<vmem>>, vector<16x128xf32>,
    return
  }
  func.func @transform_0(%arg0: i32) -> (i32, i32) {
    %c0_i32 = arith.constant 0 : i32
    %c0_i32_0 = arith.constant 0 : i32
    return %arg0, %c0_i32 : i32, i32
  }
  func.func @transform_1(%arg0: i32) -> (i32, i32) {
    %c0_i32 = arith.constant 0 : i32
    %c0_i32_0 = arith.constant 0 : i32
    return %arg0, %c0_i32 : i32, i32
  }
}

</mosaic_0001>

<llo_original>
// kernel: tpu_custom_call.1
$region0: #{tpu_custom_call.1}
  #allocation0 [shape = 'u32[]', space=smem, size = 0x4, offset = 0x4, fixed_abs, tag = 'smem constant byte address 0x4 - core index']
  #allocation1 [shape = 'u32[144,128]{1,0:T(1,128)}', space=vmem, size = 0x12000, scoped, tag = 'internal scratch']
  %s0 = inlined_call_operand.hbm [shape: f32[16,128], index: 0, kind: input, shape index: {}]
  %s1 = inlined_call_operand.hbm [shape: f32[16,128], index: 1, kind: output, shape index: {}]
  %s2 = sld [smem:[#allocation0]]
  $region18: #{tpu_custom_call.1} parent=0
    _
  %s4 = ssub.s32 1, %s2
  %s5 = scalar_select 0, %s4, %s2
  $region1: #{tpu_custom_call.1} parent=0
    #allocation2 [shape = 'u8[8192]{0}', space=vmem, size = 0x2000, scoped, tag = 'input window, operand 0, single buffered']
    #allocation3 [shape = 's32[1]{0}', space=sflag, size = 0x4, scoped, tag = 'scoped memory for tpu_custom_call.1']
    #allocation4 [shape = 's32[1]{0}', space=sflag, size = 0x4, scoped, tag = 'scoped memory for tpu_custom_call.1']
    #allocation5 [shape = 'u8[8192]{0}', space=vmem, size = 0x2000, scoped, tag = 'output window, operand 0, single buffered']
    %6 = vsyncpa [#allocation3], 0
    %7 = vsyncpa [#allocation4], 0
    // Predicated region
    $region2: #{tpu_custom_call.1} parent=1 // pred_check
      _
    $region3: #{tpu_custom_call.1} parent=1 // pred_check_branch
      %9 = sbr.rel (0) target = $region5
    $region4: #{tpu_custom_call.1} parent=1 // pred_region
      %s11 = ssub.s32 256, 256
      %12 = vsyncadd [#allocation3], %s11
      %s13 = sshll.u32 [#allocation2], 4
      %s14 = int_to_ptr.vmem [resolvable:$true] %s13
      %19 = dma.hbm_to_vmem [thread:$0]  %s0, 256, %s14, [#allocation3], 128, 128, 8
    $region5: #{tpu_custom_call.1} parent=1 // pred_fallthru
      _
    // Predicated region
    $region6: #{tpu_custom_call.1} parent=1 // pred_check
      _
    $region7: #{tpu_custom_call.1} parent=1 // pred_check_branch
      %21 = sbr.rel (0) target = $region9
    $region8: #{tpu_custom_call.1} parent=1 // pred_region
      %22 = dma.done [#allocation3], 256
    $region9: #{tpu_custom_call.1} parent=1 // pred_fallthru
      _
    %v23 = vld [vmem:[#allocation2] sm:$0xff]
    %v24 = vld [vmem:[#allocation2 + $0x8] sm:$0xff]
    %vm25 = vcmp.ne.f32.partialorder %v23, %v23
    %vm26 = vcmp.ne.f32.partialorder %v24, %v24
    %v27 = vsel %vm25, %v23, 0.7310586
    %v28 = vsel %vm26, %v24, 0.7310586
    %29 = vst [vmem:[#allocation5] sm:$0xff] %v27
    %30 = vst [vmem:[#allocation5 + $0x8] sm:$0xff] %v28
    // Predicated region
    $region10: #{tpu_custom_call.1} parent=1 // pred_check
      _
    $region11: #{tpu_custom_call.1} parent=1 // pred_check_branch
      %32 = sbr.rel (0) target = $region13
    $region12: #{tpu_custom_call.1} parent=1 // pred_region
      %s34 = ssub.s32 256, 256
      %35 = vsyncadd [#allocation4], %s34
      %s36 = sshll.u32 [#allocation5], 4
      %s37 = int_to_ptr.vmem [resolvable:$true] %s36
      %42 = dma.vmem_to_hbm [thread:$0]  %s37, 256, %s1, [#allocation4], 128, 128, 8
    $region13: #{tpu_custom_call.1} parent=1 // pred_fallthru
      _
    // Predicated region
    $region14: #{tpu_custom_call.1} parent=1 // pred_check
      _
    $region15: #{tpu_custom_call.1} parent=1 // pred_check_branch
      %44 = sbr.rel (0) target = $region17
    $region16: #{tpu_custom_call.1} parent=1 // pred_region
      %45 = dma.done [#allocation4], 256
    $region17: #{tpu_custom_call.1} parent=1 // pred_fallthru
      _
    %46 = vsyncpa [#allocation3], 1
    %47 = vsyncpa [#allocation4], 1

</llo_original>
